<compile_context>
chip_gen: v5e
topology: v5e:2x2
jax: 0.10.0
libtpu: 0.0.40
codegen_flags: <defaults>
</compile_context>

<pallas_src>
import functools

import jax
import jax.numpy as jnp
from jax.experimental import pallas as pl
from jax.experimental.pallas import tpu as pltpu


_TARGET_BLOCK_BYTES = 2 * 1024 * 1024  # ~2 MiB per input block (x2 for double-buffer)


def _make_tv_kernel(h: int, w: int):
    """TV kernel over a (TB, H, W) tile. Closes over Python ints only."""

    def tv_kernel(x_ref, o_ref, acc_h_ref, acc_w_ref):
        s = pl.program_id(1)

        @pl.when(s == 0)
        def _init():
            acc_h_ref[...] = jnp.zeros_like(acc_h_ref)
            acc_w_ref[...] = jnp.zeros_like(acc_w_ref)

        x = x_ref[...]  # (TB, H, W), kept in the input dtype (bf16 ok on v6e/v7x)

        # Neighbour values via XLU rotations: roll by n-1 gives
        # rolled[..., i, ...] == x[..., (i+1) % n, ...].  The wrap-around
        # row / column are dropped once per slice in _finalize (not per step).
        x_down = pltpu.roll(x, shift=h - 1, axis=1)    # x[t, (i+1) % H, j]
        x_right = pltpu.roll(x, shift=w - 1, axis=2)   # x[t, i, (j+1) % W]

        dh = jnp.abs(x_down - x)
        dw = jnp.abs(x_right - x)

        # Hot loop: no wrap masking here.  Reduce only the leading (image)
        # axis -> pure VPU adds; keep the (H, W) lane/sublane structure in the
        # f32 accumulators so the hot loop never touches the XLU reduce tree
        # or an SMEM scalar RMW.
        acc_h_ref[...] += jnp.sum(dh.astype(jnp.float32), axis=0)
        acc_w_ref[...] += jnp.sum(dw.astype(jnp.float32), axis=0)

        # Single wrap-mask + cross-lane/sublane reduce per parallel slice.
        @pl.when(s == pl.num_programs(1) - 1)
        def _finalize():
            row = jax.lax.broadcasted_iota(jnp.int32, (h, w), 0)
            col = jax.lax.broadcasted_iota(jnp.int32, (h, w), 1)
            tv_h = jnp.sum(jnp.where(row < h - 1, acc_h_ref[...], 0.0))
            tv_w = jnp.sum(jnp.where(col < w - 1, acc_w_ref[...], 0.0))
            o_ref[0, 0] = tv_h + tv_w

    return tv_kernel


@functools.partial(jax.jit, static_argnames=("weight", "block_images"))
def tv_loss_pallas(x: jax.Array, weight: float = 1.0,
                   block_images: int | None = None) -> jax.Array:
    """x: (B, C, H, W) NCHW tensor. Returns scalar f32 TV loss."""
    b, c, h, w = x.shape
    bc = b * c
    xf = x.reshape(bc, h, w)  # fold batch & channel into the image axis

    # Pick how many images to pack per block (biggest single perf lever).
    img_bytes = h * w * x.dtype.itemsize
    if block_images is None:
        tb = max(1, min(bc, _TARGET_BLOCK_BYTES // max(1, img_bytes)))
    else:
        tb = max(1, min(bc, int(block_images)))

    num_blocks = -(-bc // tb)
    num_par = 2 if num_blocks >= 2 else 1        # megacore split on v7x
    steps = -(-num_blocks // num_par)
    bc_pad = num_par * steps * tb
    if bc_pad != bc:
        # Zero-padded images contribute exactly 0 to the TV sum.
        xf = jnp.pad(xf, ((0, bc_pad - bc), (0, 0), (0, 0)))

    # VMEM budget: double-buffered input block + two (H, W) f32 accumulators.
    vmem_bytes = 2 * tb * img_bytes + 2 * h * w * 4 + (2 << 20)
    vmem_limit = int(min(64 << 20, max(vmem_bytes, 16 << 20)))

    partials = pl.pallas_call(
        _make_tv_kernel(h, w),
        out_shape=jax.ShapeDtypeStruct((num_par, 1), jnp.float32),
        grid=(num_par, steps),
        in_specs=[
            pl.BlockSpec((tb, h, w), lambda pi, si: (pi * steps + si, 0, 0)),
        ],
        out_specs=pl.BlockSpec(
            (1, 1), lambda pi, si: (pi, 0), memory_space=pltpu.MemorySpace.SMEM
        ),
        scratch_shapes=[
            pltpu.VMEM((h, w), jnp.float32),   # tv_h accumulator
            pltpu.VMEM((h, w), jnp.float32),   # tv_w accumulator
        ],
        compiler_params=pltpu.CompilerParams(
            dimension_semantics=("parallel", "arbitrary"),
            vmem_limit_bytes=vmem_limit,
        ),
        cost_estimate=pl.CostEstimate(
            flops=6 * bc * h * w,
            transcendentals=0,
            bytes_accessed=bc_pad * h * w * x.dtype.itemsize + num_par * 4,
        ),
    )(xf)

    # Weight / normalization applied here as a plain Python float (never close
    # over traced scalars inside the kernel).
    scale = float(weight) / float(b * c * h * w)
    return jnp.sum(partials) * scale


def tv_loss_module(out_dict, data_dict, weight: float = 1.0) -> jax.Array:
    """Mirrors TVLoss.forward(out, data): uses out['pred'] (gt is unused)."""
    x = out_dict["pred"]
    _ = data_dict["gt"]  # present for interface parity; not used by the loss
    return tv_loss_pallas(x, weight=weight)


def _tv_loss_ref(x: jax.Array, weight: float = 1.0) -> jax.Array:
    # Differences in the input dtype (like the kernel), summed in f32.
    b, c, h, w = x.shape
    dh = jnp.abs(x[:, :, 1:, :] - x[:, :, :-1, :]).astype(jnp.float32)
    dw = jnp.abs(x[:, :, :, 1:] - x[:, :, :, :-1]).astype(jnp.float32)
    return weight * (jnp.sum(dh) + jnp.sum(dw)) / (b * c * h * w)


if __name__ == "__main__":
    key = jax.random.PRNGKey(0)
    kx, ky = jax.random.split(key)
    B, C, H, W = 2, 4, 16, 128
    pred = jax.random.normal(kx, (B, C, H, W), dtype=jnp.float32)
    gt = jax.random.normal(ky, (B, C, H, W), dtype=jnp.float32)

    # 1) Default (auto block size) path via the module-style wrapper.
    weight = 0.5
    loss = jax.block_until_ready(
        tv_loss_module({"pred": pred}, {"gt": gt}, weight=weight))
    ref = _tv_loss_ref(pred, weight=weight)
    assert jnp.allclose(loss, ref, rtol=2e-5, atol=2e-5), (loss, ref)

    # 2) Multi-step / megacore / zero-padded-remainder path (TB=3 over 8 imgs).
    loss2 = jax.block_until_ready(tv_loss_pallas(pred, weight=1.0, block_images=3))
    ref2 = _tv_loss_ref(pred, weight=1.0)
    assert jnp.allclose(loss2, ref2, rtol=2e-5, atol=2e-5), (loss2, ref2)

    # 3) Different spatial shape (single-block path).
    pred3 = jax.random.normal(ky, (1, 2, 8, 256), dtype=jnp.float32)
    loss3 = jax.block_until_ready(tv_loss_pallas(pred3, weight=2.0))
    ref3 = _tv_loss_ref(pred3, weight=2.0)
    assert jnp.allclose(loss3, ref3, rtol=2e-5, atol=2e-5), (loss3, ref3)

    print("KERNEL_OK")
</pallas_src>

<mosaic_0001>
module attributes {stable_mosaic.version = 11 : i64} {
  func.func @tv_kernel(%arg0: i32, %arg1: i32, %arg2: memref<8x16x128xf32, #tpu.memory_space<vmem>>, %arg3: memref<1x1xf32, #tpu.memory_space<smem>>, %arg4: memref<16x128xf32, #tpu.memory_space<vmem>>, %arg5: memref<16x128xf32, #tpu.memory_space<vmem>>) attributes {dimension_semantics = [#tpu.dimension_semantics<parallel>, #tpu.dimension_semantics<arbitrary>], iteration_bounds = array<i64: 1, 1>, scalar_prefetch = 0 : i64, scratch_operands = 2 : i64, tpu.core_type = #tpu.core_type<tc>, window_params = [{transform_indices = @transform_0, window_bounds = array<i64: 8, 16, 128>}, {transform_indices = @transform_1, window_bounds = array<i64: 1, 1>}]} {
    %c0_i32 = arith.constant 0 : i32
    %0 = arith.cmpi eq, %arg1, %c0_i32 : i32
    %1 = arith.extui %0 : i1 to i32
    %c0_i32_0 = arith.constant 0 : i32
    %2 = arith.cmpi ne, %1, %c0_i32_0 : i32
    scf.if %2 {
      %cst_14 = arith.constant 0.000000e+00 : f32
      %21 = vector.broadcast %cst_14 : f32 to vector<16x128xf32>
      %c0_15 = arith.constant 0 : index
      %c0_16 = arith.constant 0 : index
      %22 = vector.load %arg4[%c0_15, %c0_16] : memref<16x128xf32, #tpu.memory_space<vmem>>, vector<16x128xf32>
      tpu.vector_store %arg4[%c0_15, %c0_16], %21 {strides = array<i32>} : memref<16x128xf32, #tpu.memory_space<vmem>>, vector<16x128xf32>,
      %cst_17 = arith.constant 0.000000e+00 : f32
      %23 = vector.broadcast %cst_17 : f32 to vector<16x128xf32>
      %c0_18 = arith.constant 0 : index
      %c0_19 = arith.constant 0 : index
      %24 = vector.load %arg5[%c0_18, %c0_19] : memref<16x128xf32, #tpu.memory_space<vmem>>, vector<16x128xf32>
      tpu.vector_store %arg5[%c0_18, %c0_19], %23 {strides = array<i32>} : memref<16x128xf32, #tpu.memory_space<vmem>>, vector<16x128xf32>,
    } else {
    }
    %c0 = arith.constant 0 : index
    %c0_1 = arith.constant 0 : index
    %c0_2 = arith.constant 0 : index
    %3 = vector.load %arg2[%c0, %c0_1, %c0_2] : memref<8x16x128xf32, #tpu.memory_space<vmem>>, vector<8x16x128xf32>
    %c15_i32 = arith.constant 15 : i32
    %4 = tpu.dynamic_rotate %3 by %c15_i32 dim 1 : vector<8x16x128xf32>, i32 -> vector<8x16x128xf32>
    %c127_i32 = arith.constant 127 : i32
    %5 = tpu.dynamic_rotate %3 by %c127_i32 dim 2 : vector<8x16x128xf32>, i32 -> vector<8x16x128xf32>
    %6 = arith.subf %4, %3 : vector<8x16x128xf32>
    %7 = math.absf %6 : vector<8x16x128xf32>
    %8 = arith.subf %5, %3 : vector<8x16x128xf32>
    %9 = math.absf %8 : vector<8x16x128xf32>
    %c0_3 = arith.constant 0 : index
    %c0_4 = arith.constant 0 : index
    %10 = vector.load %arg4[%c0_3, %c0_4] : memref<16x128xf32, #tpu.memory_space<vmem>>, vector<16x128xf32>
    %cst = arith.constant dense<0.000000e+00> : vector<16x128xf32>
    %11 = vector.multi_reduction <add>, %7, %cst [0] : vector<8x16x128xf32> to vector<16x128xf32>
    %12 = arith.addf %10, %11 : vector<16x128xf32>
    %c0_5 = arith.constant 0 : index
    %c0_6 = arith.constant 0 : index
    %13 = vector.load %arg4[%c0_5, %c0_6] : memref<16x128xf32, #tpu.memory_space<vmem>>, vector<16x128xf32>
    tpu.vector_store %arg4[%c0_5, %c0_6], %12 {strides = array<i32>} : memref<16x128xf32, #tpu.memory_space<vmem>>, vector<16x128xf32>,
    %c0_7 = arith.constant 0 : index
    %c0_8 = arith.constant 0 : index
    %14 = vector.load %arg5[%c0_7, %c0_8] : memref<16x128xf32, #tpu.memory_space<vmem>>, vector<16x128xf32>
    %cst_9 = arith.constant dense<0.000000e+00> : vector<16x128xf32>
    %15 = vector.multi_reduction <add>, %9, %cst_9 [0] : vector<8x16x128xf32> to vector<16x128xf32>
    %16 = arith.addf %14, %15 : vector<16x128xf32>
    %c0_10 = arith.constant 0 : index
    %c0_11 = arith.constant 0 : index
    %17 = vector.load %arg5[%c0_10, %c0_11] : memref<16x128xf32, #tpu.memory_space<vmem>>, vector<16x128xf32>
    tpu.vector_store %arg5[%c0_10, %c0_11], %16 {strides = array<i32>} : memref<16x128xf32, #tpu.memory_space<vmem>>, vector<16x128xf32>,
    %c0_i32_12 = arith.constant 0 : i32
    %18 = arith.cmpi eq, %arg1, %c0_i32_12 : i32
    %19 = arith.extui %18 : i1 to i32
    %c0_i32_13 = arith.constant 0 : i32
    %20 = arith.cmpi ne, %19, %c0_i32_13 : i32
    scf.if %20 {
      %21 = tpu.iota {dimensions = array<i32: 0>} : vector<16x128xi32>
      %22 = tpu.iota {dimensions = array<i32: 1>} : vector<16x128xi32>
      %c15_i32_14 = arith.constant 15 : i32
      %23 = vector.broadcast %c15_i32_14 : i32 to vector<16x128xi32>
      %24 = arith.cmpi slt, %21, %23 : vector<16x128xi32>
      %c0_15 = arith.constant 0 : index
      %c0_16 = arith.constant 0 : index
      %25 = vector.load %arg4[%c0_15, %c0_16] : memref<16x128xf32, #tpu.memory_space<vmem>>, vector<16x128xf32>
      %cst_17 = arith.constant 0.000000e+00 : f32
      %26 = vector.broadcast %cst_17 : f32 to vector<16x128xf32>
      %27 = arith.select %24, %25, %26 : vector<16x128xi1>, vector<16x128xf32>
      %28 = vector.shape_cast %27 : vector<16x128xf32> to vector<1x16x128xf32>
      %cst_18 = arith.constant dense<0.000000e+00> : vector<1xf32>
      %29 = vector.multi_reduction <add>, %28, %cst_18 [1, 2] : vector<1x16x128xf32> to vector<1xf32>
      %30 = vector.shape_cast %29 : vector<1xf32> to vector<1x1x1xf32>
      %31 = vector.extract %30[0, 0, 0] : f32 from vector<1x1x1xf32>
      %c127_i32_19 = arith.constant 127 : i32
      %32 = vector.broadcast %c127_i32_19 : i32 to vector<16x128xi32>
      %33 = arith.cmpi slt, %22, %32 : vector<16x128xi32>
      %c0_20 = arith.constant 0 : index
      %c0_21 = arith.constant 0 : index
      %34 = vector.load %arg5[%c0_20, %c0_21] : memref<16x128xf32, #tpu.memory_space<vmem>>, vector<16x128xf32>
      %cst_22 = arith.constant 0.000000e+00 : f32
      %35 = vector.broadcast %cst_22 : f32 to vector<16x128xf32>
      %36 = arith.select %33, %34, %35 : vector<16x128xi1>, vector<16x128xf32>
      %37 = vector.shape_cast %36 : vector<16x128xf32> to vector<1x16x128xf32>
      %cst_23 = arith.constant dense<0.000000e+00> : vector<1xf32>
      %38 = vector.multi_reduction <add>, %37, %cst_23 [1, 2] : vector<1x16x128xf32> to vector<1xf32>
      %39 = vector.shape_cast %38 : vector<1xf32> to vector<1x1x1xf32>
      %40 = vector.extract %39[0, 0, 0] : f32 from vector<1x1x1xf32>
      %41 = arith.addf %31, %40 : f32
      %c0_24 = arith.constant 0 : index
      %c0_25 = arith.constant 0 : index
      %42 = memref.load %arg3[%c0_24, %c0_25] : memref<1x1xf32, #tpu.memory_space<smem>>
      memref.store %41, %arg3[%c0_24, %c0_25] : memref<1x1xf32, #tpu.memory_space<smem>>
    } else {
    }
    return
  }
  func.func @transform_0(%arg0: i32, %arg1: i32) -> (i32, i32, i32) {
    %c1_i32 = arith.constant 1 : i32
    %0 = arith.muli %arg0, %c1_i32 : i32
    %1 = arith.addi %0, %arg1 : i32
    %c0_i32 = arith.constant 0 : i32
    %c0_i32_0 = arith.constant 0 : i32
    %c0_i32_1 = arith.constant 0 : i32
    return %1, %c0_i32, %c0_i32_0 : i32, i32, i32
  }
  func.func @transform_1(%arg0: i32, %arg1: i32) -> (i32, i32) {
    %c0_i32 = arith.constant 0 : i32
    %c0_i32_0 = arith.constant 0 : i32
    return %arg0, %c0_i32 : i32, i32
  }
}

</mosaic_0001>

<llo_original>
// kernel: tv_loss_pallas.1
$region0: #{tv_loss_pallas.1}
  #allocation0 [shape = 'u32[]', space=smem, size = 0x4, offset = 0x4, fixed_abs, tag = 'smem constant byte address 0x4 - core index']
  #allocation1 [shape = 'u32[72,128]{1,0:T(1,128)}', space=vmem, size = 0x9000, scoped, tag = 'internal scratch']
  #allocation2 [shape = 'f32[16,128]{1,0:T(8,128)}', space=vmem, size = 0x2000, scoped, tag = 'scratch operand']
  #allocation3 [shape = 'f32[16,128]{1,0:T(8,128)}', space=vmem, size = 0x2000, scoped, tag = 'scratch operand']
  %s0 = inlined_call_operand.hbm [shape: f32[8,16,128], index: 0, kind: input, shape index: {}]
  %s1 = inlined_call_operand.hbm [shape: f32[1,1], index: 1, kind: output, shape index: {}]
  %s2 = sld [smem:[#allocation0]]
  $region26: #{tv_loss_pallas.1} parent=0
    _
  %s4 = ssub.s32 1, %s2
  %s5 = scalar_select 0, %s4, %s2
  $region1: #{tv_loss_pallas.1} parent=0
    #allocation4 [shape = 'u8[65536]{0}', space=vmem, size = 0x10000, scoped, tag = 'input window, operand 0, single buffered']
    #allocation5 [shape = 's32[1]{0}', space=sflag, size = 0x4, scoped, tag = 'scoped memory for tv_loss_pallas.1']
    #allocation6 [shape = 's32[1]{0}', space=sflag, size = 0x4, scoped, tag = 'scoped memory for tv_loss_pallas.1']
    #allocation7 [shape = 'u8[512]{0}', space=smem, size = 0x200, scoped, tag = 'output window, operand 0, single buffered']
    %6 = vsyncpa [#allocation5], 0
    %7 = vsyncpa [#allocation6], 0
    // Predicated region
    $region2: #{tv_loss_pallas.1} parent=1 // pred_check
      _
    $region3: #{tv_loss_pallas.1} parent=1 // pred_check_branch
      %9 = sbr.rel (0) target = $region5
    $region4: #{tv_loss_pallas.1} parent=1 // pred_region
      %s10 = sadd.s32 0, 0
      %s11 = smul.u32 8, %s10
      %13 = vsyncadd [#allocation5], 0
      %s14 = smul.addr %s11, 2
      %s15 = smul.addr %s14, 8
      %s16 = scalar_lea.hbm %s0, %s15
      %s17 = sshll.u32 %s16, 4
      %s18 = int_to_ptr.hbm [resolvable:$true] %s17
      %s19 = sshll.u32 [#allocation4], 4
      %s20 = int_to_ptr.vmem [resolvable:$true] %s19
      %25 = dma.hbm_to_vmem [thread:$0]  %s18, 2048, %s20, [#allocation5], 128, 128, 8
    $region5: #{tv_loss_pallas.1} parent=1 // pred_fallthru
      _
    // Predicated region
    $region6: #{tv_loss_pallas.1} parent=1 // pred_check
      _
    $region7: #{tv_loss_pallas.1} parent=1 // pred_check_branch
      %27 = sbr.rel (0) target = $region9
    $region8: #{tv_loss_pallas.1} parent=1 // pred_region
      %29 = dma.done [#allocation5], 2048
    $region9: #{tv_loss_pallas.1} parent=1 // pred_fallthru
      _
    %s30 = sadd.s32 0, 0
    %s31 = smul.u32 8, %s30
    %p32 = scmp.eq.s32.totalorder 0, 0
    // Predicated region
    $region10: #{tv_loss_pallas.1} parent=1 // pred_check
      %p33 = pneg %p32
    $region11: #{tv_loss_pallas.1} parent=1 // pred_check_branch
      %35 = sbr.rel (%p33) target = $region13
    $region12: #{tv_loss_pallas.1} parent=1 // pred_region
      %36 = vst [vmem:[#allocation2] sm:$0xff] 0.0
      %37 = vst [vmem:[#allocation2 + $0x8] sm:$0xff] 0.0
      %38 = vst [vmem:[#allocation3] sm:$0xff] 0.0
      %39 = vst [vmem:[#allocation3 + $0x8] sm:$0xff] 0.0
    $region13: #{tv_loss_pallas.1} parent=1 // pred_fallthru
      _
    %v40 = vld [vmem:[#allocation4] sm:$0xff]
    %v41 = vld [vmem:[#allocation4 + $0x8] sm:$0xff]
    %v42 = vld [vmem:[#allocation4 + $0x10] sm:$0xff]
    %v43 = vld [vmem:[#allocation4 + $0x18] sm:$0xff]
    %v44 = vld [vmem:[#allocation4 + $0x20] sm:$0xff]
    %v45 = vld [vmem:[#allocation4 + $0x28] sm:$0xff]
    %v46 = vld [vmem:[#allocation4 + $0x30] sm:$0xff]
    %v47 = vld [vmem:[#allocation4 + $0x38] sm:$0xff]
    %v48 = vld [vmem:[#allocation4 + $0x40] sm:$0xff]
    %v49 = vld [vmem:[#allocation4 + $0x48] sm:$0xff]
    %v50 = vld [vmem:[#allocation4 + $0x50] sm:$0xff]
    %v51 = vld [vmem:[#allocation4 + $0x58] sm:$0xff]
    %v52 = vld [vmem:[#allocation4 + $0x60] sm:$0xff]
    %v53 = vld [vmem:[#allocation4 + $0x68] sm:$0xff]
    %v54 = vld [vmem:[#allocation4 + $0x70] sm:$0xff]
    %v55 = vld [vmem:[#allocation4 + $0x78] sm:$0xff]
    %v56 = vrot.slane %v40, 1
    %v57 = vrot.slane %v42, 1
    %v58 = vrot.slane %v44, 1
    %v59 = vrot.slane %v46, 1
    %v60 = vrot.slane %v48, 1
    %v61 = vrot.slane %v50, 1
    %v62 = vrot.slane %v52, 1
    %v63 = vrot.slane %v54, 1
    %v64 = vrot.slane %v41, 1
    %v65 = vrot.slane %v43, 1
    %v66 = vrot.slane %v45, 1
    %v67 = vrot.slane %v47, 1
    %v68 = vrot.slane %v49, 1
    %v69 = vrot.slane %v51, 1
    %v70 = vrot.slane %v53, 1
    %v71 = vrot.slane %v55, 1
    %v72 = vlaneseq
    %v73 = vshrl.u32 %v72, 7
    %vm74 = vcmp.lt.s32.totalorder %v73, 7
    %v75 = vsel %vm74, %v56, %v64
    %v76 = vsel %vm74, %v57, %v65
    %v77 = vsel %vm74, %v58, %v66
    %v78 = vsel %vm74, %v59, %v67
    %v79 = vsel %vm74, %v60, %v68
    %v80 = vsel %vm74, %v61, %v69
    %v81 = vsel %vm74, %v62, %v70
    %v82 = vsel %vm74, %v63, %v71
    %v83 = vsel %vm74, %v64, %v56
    %v84 = vsel %vm74, %v65, %v57
    %v85 = vsel %vm74, %v66, %v58
    %v86 = vsel %vm74, %v67, %v59
    %v87 = vsel %vm74, %v68, %v60
    %v88 = vsel %vm74, %v69, %v61
    %v89 = vsel %vm74, %v70, %v62
    %v90 = vsel %vm74, %v71, %v63
    %91 = vrot.lane.b32.xlu0 %v40, 127
    %v92 = vpop.permute.xlu0 %91
    %93 = vrot.lane.b32.xlu0 %v41, 127
    %v94 = vpop.permute.xlu0 %93
    %95 = vrot.lane.b32.xlu0 %v42, 127
    %v96 = vpop.permute.xlu0 %95
    %97 = vrot.lane.b32.xlu0 %v43, 127
    %v98 = vpop.permute.xlu0 %97
    %99 = vrot.lane.b32.xlu0 %v44, 127
    %v100 = vpop.permute.xlu0 %99
    %101 = vrot.lane.b32.xlu0 %v45, 127
    %v102 = vpop.permute.xlu0 %101
    %103 = vrot.lane.b32.xlu0 %v46, 127
    %v104 = vpop.permute.xlu0 %103
    %105 = vrot.lane.b32.xlu0 %v47, 127
    %v106 = vpop.permute.xlu0 %105
    %107 = vrot.lane.b32.xlu0 %v48, 127
    %v108 = vpop.permute.xlu0 %107
    %109 = vrot.lane.b32.xlu0 %v49, 127
    %v110 = vpop.permute.xlu0 %109
    %111 = vrot.lane.b32.xlu0 %v50, 127
    %v112 = vpop.permute.xlu0 %111
    %113 = vrot.lane.b32.xlu0 %v51, 127
    %v114 = vpop.permute.xlu0 %113
    %115 = vrot.lane.b32.xlu0 %v52, 127
    %v116 = vpop.permute.xlu0 %115
    %117 = vrot.lane.b32.xlu0 %v53, 127
    %v118 = vpop.permute.xlu0 %117
    %119 = vrot.lane.b32.xlu0 %v54, 127
    %v120 = vpop.permute.xlu0 %119
    %121 = vrot.lane.b32.xlu0 %v55, 127
    %v122 = vpop.permute.xlu0 %121
    %v123 = vsub.f32 %v75, %v40
    %v124 = vsub.f32 %v83, %v41
    %v125 = vsub.f32 %v76, %v42
    %v126 = vsub.f32 %v84, %v43
    %v127 = vsub.f32 %v77, %v44
    %v128 = vsub.f32 %v85, %v45
    %v129 = vsub.f32 %v78, %v46
    %v130 = vsub.f32 %v86, %v47
    %v131 = vsub.f32 %v79, %v48
    %v132 = vsub.f32 %v87, %v49
    %v133 = vsub.f32 %v80, %v50
    %v134 = vsub.f32 %v88, %v51
    %v135 = vsub.f32 %v81, %v52
    %v136 = vsub.f32 %v89, %v53
    %v137 = vsub.f32 %v82, %v54
    %v138 = vsub.f32 %v90, %v55
    %v139 = vand.u32 2147483647, %v123
    %v140 = vand.u32 2147483647, %v124
    %v141 = vand.u32 2147483647, %v125
    %v142 = vand.u32 2147483647, %v126
    %v143 = vand.u32 2147483647, %v127
    %v144 = vand.u32 2147483647, %v128
    %v145 = vand.u32 2147483647, %v129
    %v146 = vand.u32 2147483647, %v130
    %v147 = vand.u32 2147483647, %v131
    %v148 = vand.u32 2147483647, %v132
    %v149 = vand.u32 2147483647, %v133
    %v150 = vand.u32 2147483647, %v134
    %v151 = vand.u32 2147483647, %v135
    %v152 = vand.u32 2147483647, %v136
    %v153 = vand.u32 2147483647, %v137
    %v154 = vand.u32 2147483647, %v138
    %v155 = vsub.f32 %v92, %v40
    %v156 = vsub.f32 %v94, %v41
    %v157 = vsub.f32 %v96, %v42
    %v158 = vsub.f32 %v98, %v43
    %v159 = vsub.f32 %v100, %v44
    %v160 = vsub.f32 %v102, %v45
    %v161 = vsub.f32 %v104, %v46
    %v162 = vsub.f32 %v106, %v47
    %v163 = vsub.f32 %v108, %v48
    %v164 = vsub.f32 %v110, %v49
    %v165 = vsub.f32 %v112, %v50
    %v166 = vsub.f32 %v114, %v51
    %v167 = vsub.f32 %v116, %v52
    %v168 = vsub.f32 %v118, %v53
    %v169 = vsub.f32 %v120, %v54
    %v170 = vsub.f32 %v122, %v55
    %v171 = vand.u32 2147483647, %v155
    %v172 = vand.u32 2147483647, %v156
    %v173 = vand.u32 2147483647, %v157
    %v174 = vand.u32 2147483647, %v158
    %v175 = vand.u32 2147483647, %v159
    %v176 = vand.u32 2147483647, %v160
    %v177 = vand.u32 2147483647, %v161
    %v178 = vand.u32 2147483647, %v162
    %v179 = vand.u32 2147483647, %v163
    %v180 = vand.u32 2147483647, %v164
    %v181 = vand.u32 2147483647, %v165
    %v182 = vand.u32 2147483647, %v166
    %v183 = vand.u32 2147483647, %v167
    %v184 = vand.u32 2147483647, %v168
    %v185 = vand.u32 2147483647, %v169
    %v186 = vand.u32 2147483647, %v170
    %v187 = vld [vmem:[#allocation2] sm:$0xff]
    %v188 = vld [vmem:[#allocation2 + $0x8] sm:$0xff]
    %v189 = vadd.f32 %v139, %v141
    %v190 = vadd.f32 %v189, %v143
    %v191 = vadd.f32 %v190, %v145
    %v192 = vadd.f32 %v191, %v147
    %v193 = vadd.f32 %v192, %v149
    %v194 = vadd.f32 %v193, %v151
    %v195 = vadd.f32 %v194, %v153
    %v196 = vadd.f32 %v140, %v142
    %v197 = vadd.f32 %v196, %v144
    %v198 = vadd.f32 %v197, %v146
    %v199 = vadd.f32 %v198, %v148
    %v200 = vadd.f32 %v199, %v150
    %v201 = vadd.f32 %v200, %v152
    %v202 = vadd.f32 %v201, %v154
    %v203 = vadd.f32 %v187, %v195
    %v204 = vadd.f32 %v188, %v202
    %205 = vst [vmem:[#allocation2] sm:$0xff] %v203
    %206 = vst [vmem:[#allocation2 + $0x8] sm:$0xff] %v204
    %v207 = vld [vmem:[#allocation3] sm:$0xff]
    %v208 = vld [vmem:[#allocation3 + $0x8] sm:$0xff]
    %v209 = vadd.f32 %v171, %v173
    %v210 = vadd.f32 %v209, %v175
    %v211 = vadd.f32 %v210, %v177
    %v212 = vadd.f32 %v211, %v179
    %v213 = vadd.f32 %v212, %v181
    %v214 = vadd.f32 %v213, %v183
    %v215 = vadd.f32 %v214, %v185
    %v216 = vadd.f32 %v172, %v174
    %v217 = vadd.f32 %v216, %v176
    %v218 = vadd.f32 %v217, %v178
    %v219 = vadd.f32 %v218, %v180
    %v220 = vadd.f32 %v219, %v182
    %v221 = vadd.f32 %v220, %v184
    %v222 = vadd.f32 %v221, %v186
    %v223 = vadd.f32 %v207, %v215
    %v224 = vadd.f32 %v208, %v222
    %225 = vst [vmem:[#allocation3] sm:$0xff] %v223
    %226 = vst [vmem:[#allocation3 + $0x8] sm:$0xff] %v224
    // Predicated region
    $region14: #{tv_loss_pallas.1} parent=1 // pred_check
      %p227 = pneg %p32
    $region15: #{tv_loss_pallas.1} parent=1 // pred_check_branch
      %229 = sbr.rel (%p227) target = $region17
    $region16: #{tv_loss_pallas.1} parent=1 // pred_region
      %v230 = vadd.s32 %v73, 8
      %v231 = vlaneseq
      %v232 = vand.u32 %v231, 127
      %vm233 = vcmp.lt.s32.totalorder %v73, 15
      %vm234 = vcmp.lt.s32.totalorder %v230, 15
      %v235 = vld [vmem:[#allocation2] sm:$0xff]
      %v236 = vld [vmem:[#allocation2 + $0x8] sm:$0xff]
      %v237 = vsel %vm233, %v235, 0.0
      %v238 = vsel %vm234, %v236, 0.0
      %v239 = vadd.f32 %v237, %v238
      %240 = vadd.xlane.f32.xlu0 %v239
      %v241 = vpop.xlane.xlu0 %240
      %v242 = vrot.slane %v241, 4
      %v243 = vadd.f32 %v241, %v242
      %v244 = vrot.slane %v243, 2
      %v245 = vadd.f32 %v243, %v244
      %v246 = vrot.slane %v245, 1
      %v247 = vadd.f32 %v245, %v246
      %s248 = vtos %v247
      %vm249 = vcmp.lt.s32.totalorder %v232, 127
      %v250 = vld [vmem:[#allocation3] sm:$0xff]
      %v251 = vld [vmem:[#allocation3 + $0x8] sm:$0xff]
      %v252 = vsel %vm249, %v250, 0.0
      %v253 = vsel %vm249, %v251, 0.0
      %v254 = vadd.f32 %v252, %v253
      %255 = vadd.xlane.f32.xlu0 %v254
      %v256 = vpop.xlane.xlu0 %255
      %v257 = vrot.slane %v256, 4
      %v258 = vadd.f32 %v256, %v257
      %v259 = vrot.slane %v258, 2
      %v260 = vadd.f32 %v258, %v259
      %v261 = vrot.slane %v260, 1
      %v262 = vadd.f32 %v260, %v261
      %s263 = vtos %v262
      %s264 = sadd.f32 %s248, %s263
      %s265 = scalar_lea.smem [#allocation7], 0
      %266 = sst [smem:[%s265]] %s264
    $region17: #{tv_loss_pallas.1} parent=1 // pred_fallthru
      _
    // Predicated region
    $region18: #{tv_loss_pallas.1} parent=1 // pred_check
      _
    $region19: #{tv_loss_pallas.1} parent=1 // pred_check_branch
      %268 = sbr.rel (0) target = $region21
    $region20: #{tv_loss_pallas.1} parent=1 // pred_region
      %270 = vsyncadd [#allocation6], 0
      %s272 = sshll.u32 %s1, 4
      %s273 = int_to_ptr.hbm [resolvable:$true] %s272
      %275 = dma.smem_to_hbm [#allocation7], 16, %s273, [#allocation6]
    $region21: #{tv_loss_pallas.1} parent=1 // pred_fallthru
      _
    // Predicated region
    $region22: #{tv_loss_pallas.1} parent=1 // pred_check
      _
    $region23: #{tv_loss_pallas.1} parent=1 // pred_check_branch
      %277 = sbr.rel (0) target = $region25
    $region24: #{tv_loss_pallas.1} parent=1 // pred_region
      %279 = dma.done [#allocation6], 16
    $region25: #{tv_loss_pallas.1} parent=1 // pred_fallthru
      _
    %280 = sfence
    %281 = vsyncpa [#allocation5], 1
    %282 = vsyncpa [#allocation6], 1

</llo_original>
